<compile_context>
chip_gen: v6e
topology: v6e:2x2x1
jax: 0.10.0
libtpu: 0.0.40
codegen_flags: <defaults>
</compile_context>

<pallas_src>
import functools

import jax
import jax.numpy as jnp
from jax.experimental import pallas as pl
from jax.experimental.pallas import tpu as pltpu

HIDDEN = 256


def _round_up(x, m):
    return ((x + m - 1) // m) * m


def _sigmoid(z):
    # sigmoid(z) == 0.5 * tanh(0.5 * z) + 0.5 : single EUP op, no divide.
    return 0.5 * jnp.tanh(0.5 * z) + 0.5


def actor_kernel(x_ref, w1_ref, b1_ref, w2_ref, b2_ref, w3_ref, b3_ref,
                 o_ref, *, act_dtype):
    w_dt = w1_ref.dtype
    # Cast activations to the weight dtype only at the MXU boundary; matmul
    # accumulation and the bias add stay f32, the sigmoid/tanh runs in
    # act_dtype (f32 for f32 weights, bf16 on the bf16 weight path).
    x = x_ref[...].astype(w_dt)

    z1 = jnp.dot(x, w1_ref[...], preferred_element_type=jnp.float32) + b1_ref[...]
    h1 = _sigmoid(z1.astype(act_dtype))

    z2 = jnp.dot(h1.astype(w_dt), w2_ref[...],
                 preferred_element_type=jnp.float32) + b2_ref[...]
    h2 = _sigmoid(z2.astype(act_dtype))

    z3 = jnp.dot(h2.astype(w_dt), w3_ref[...],
                 preferred_element_type=jnp.float32) + b3_ref[...]
    h3 = _sigmoid(z3.astype(act_dtype))

    o_ref[...] = (h3 * 12.0).astype(o_ref.dtype)


def actor_forward(state, params, action_dim, *, act_dtype=None, max_tile_b=256):
    """state: (B, state_dim) f32. params: kernel-ready weight dict.

    max_tile_b: 256 by default (matches the MXU and keeps >=2 tiles at B>=512
    for v7x dual-TC); raise to 512 on single-TC v5e/v6e for large batches.
    """
    B, S = state.shape
    S_pad, H = params["w1"].shape          # (round_up(state_dim, 8), 256)
    A_pad = params["w3"].shape[1]          # round_up(action_dim, 128)
    w_dtype = params["w1"].dtype
    if act_dtype is None:
        act_dtype = jnp.bfloat16 if w_dtype == jnp.bfloat16 else jnp.float32

    # Batch tiling.
    if B <= max_tile_b:
        tile_b, Bp = B, B                  # single full-array tile, no batch pad
    elif B % max_tile_b == 0:
        tile_b, Bp = max_tile_b, B
    else:
        tile_b = 128                       # keeps batch padding < 128 rows
        Bp = _round_up(B, tile_b)

    if Bp != B or S_pad != S:
        x = jnp.zeros((Bp, S_pad), state.dtype).at[:B, :S].set(state)
    else:
        x = state

    kernel = functools.partial(actor_kernel, act_dtype=act_dtype)
    out = pl.pallas_call(
        kernel,
        out_shape=jax.ShapeDtypeStruct((Bp, A_pad), jnp.float32),
        grid=(Bp // tile_b,),
        in_specs=[
            pl.BlockSpec((tile_b, S_pad), lambda i: (i, 0)),   # activations
            pl.BlockSpec((S_pad, H), lambda i: (0, 0)),        # w1 (VMEM-resident)
            pl.BlockSpec((1, H), lambda i: (0, 0)),            # b1 (f32)
            pl.BlockSpec((H, H), lambda i: (0, 0)),            # w2
            pl.BlockSpec((1, H), lambda i: (0, 0)),            # b2
            pl.BlockSpec((H, A_pad), lambda i: (0, 0)),        # w3
            pl.BlockSpec((1, A_pad), lambda i: (0, 0)),        # b3
        ],
        out_specs=pl.BlockSpec((tile_b, A_pad), lambda i: (i, 0)),
        compiler_params=pltpu.CompilerParams(
            dimension_semantics=("parallel",),                 # v7x dual-TC sharding
        ),
    )(
        x,
        params["w1"], params["b1"],
        params["w2"], params["b2"],
        params["w3"], params["b3"],
    )
    return out[:B, :action_dim]


def init_actor_params(key, state_dim, action_dim, dtype=jnp.float32):
    """nn.Linear-style U(-1/sqrt(fan_in), 1/sqrt(fan_in)) init.

    Weights are stored (in, out); the contracted input dim (state_dim) is
    padded only to a multiple of 8 (sublane), the final output dim
    (action_dim) to a multiple of 128 (lane-dense store).  Biases stay 2-D
    (1, out) and f32.  Weights may be bf16 (recommended on all generations:
    the MXU is bf16-native; accumulation stays f32 in the kernel).
    """
    s_pad = _round_up(state_dim, 8)
    a_pad = _round_up(action_dim, 128)
    dims = [(state_dim, HIDDEN, s_pad, HIDDEN),
            (HIDDEN, HIDDEN, HIDDEN, HIDDEN),
            (HIDDEN, action_dim, HIDDEN, a_pad)]
    params = {}
    keys = jax.random.split(key, 2 * len(dims))
    for i, (fan_in, fan_out, in_pad, out_pad) in enumerate(dims):
        bound = 1.0 / jnp.sqrt(jnp.float32(fan_in))
        w = jax.random.uniform(
            keys[2 * i], (fan_in, fan_out), jnp.float32, -bound, bound)
        b = jax.random.uniform(
            keys[2 * i + 1], (1, fan_out), jnp.float32, -bound, bound)
        w_p = jnp.zeros((in_pad, out_pad), jnp.float32).at[:fan_in, :fan_out].set(w)
        b_p = jnp.zeros((1, out_pad), jnp.float32).at[:, :fan_out].set(b)
        params[f"w{i + 1}"] = w_p.astype(dtype)
        params[f"b{i + 1}"] = b_p                       # biases stay f32
    return params


def _reference(state, params, state_dim, action_dim):
    """Plain-JAX reference of the same math (unpadded slices, f32)."""
    w1 = params["w1"][:state_dim].astype(jnp.float32)
    w2 = params["w2"].astype(jnp.float32)
    w3 = params["w3"][:, :action_dim].astype(jnp.float32)
    b1, b2 = params["b1"], params["b2"]
    b3 = params["b3"][:, :action_dim]
    h = jax.nn.sigmoid(state @ w1 + b1)
    h = jax.nn.sigmoid(h @ w2 + b2)
    return jax.nn.sigmoid(h @ w3 + b3) * 12.0


if __name__ == "__main__":
    # plot.py state is [rx, ry, vx, vy] -> state_dim = 4; pick action_dim = 2.
    state_dim, action_dim = 4, 2
    key = jax.random.PRNGKey(0)
    k_state, k_params, k_big, k_odd = jax.random.split(key, 4)

    params = init_actor_params(k_params, state_dim, action_dim, jnp.float32)

    # --- small-batch latency path: single full-array tile, no batch pad ----
    state = jax.random.normal(k_state, (2, state_dim), jnp.float32)
    out = jax.block_until_ready(actor_forward(state, params, action_dim))
    ref = _reference(state, params, state_dim, action_dim)
    assert out.shape == (2, action_dim)
    assert jnp.allclose(out, ref, atol=1e-4, rtol=1e-4)

    # --- large batch: two 256-row tiles (exercises the grid / dual-TC path) -
    big_state = jax.random.normal(k_big, (512, state_dim), jnp.float32)
    out_big = jax.block_until_ready(actor_forward(big_state, params, action_dim))
    ref_big = _reference(big_state, params, state_dim, action_dim)
    assert jnp.allclose(out_big, ref_big, atol=1e-4, rtol=1e-4)

    # --- ragged batch: 128-row tiles keep batch padding under 128 rows ------
    odd_state = jax.random.normal(k_odd, (300, state_dim), jnp.float32)
    out_odd = jax.block_until_ready(actor_forward(odd_state, params, action_dim))
    ref_odd = _reference(odd_state, params, state_dim, action_dim)
    assert out_odd.shape == (300, action_dim)
    assert jnp.allclose(out_odd, ref_odd, atol=1e-4, rtol=1e-4)

    # --- bf16 weights + bf16 epilogue (v6e/v7x path), loose tolerance -------
    # NOTE: the f32 state is cast to bf16 at the layer-1 MXU boundary, which
    # the f32 reference does not do; this is a documented precision trade-off.
    params_bf16 = init_actor_params(k_params, state_dim, action_dim, jnp.bfloat16)
    out_bf16 = jax.block_until_ready(actor_forward(big_state, params_bf16, action_dim))
    ref_bf16 = _reference(big_state, params_bf16, state_dim, action_dim)
    assert jnp.allclose(out_bf16, ref_bf16, atol=0.3, rtol=0.05)

    print("KERNEL_OK")
</pallas_src>

<mosaic_0001>
module attributes {stable_mosaic.version = 11 : i64} {
  func.func @actor_kernel(%arg0: i32, %arg1: memref<2x8xf32, #tpu.memory_space<vmem>>, %arg2: memref<8x256xf32, #tpu.memory_space<vmem>>, %arg3: memref<1x256xf32, #tpu.memory_space<vmem>>, %arg4: memref<256x256xf32, #tpu.memory_space<vmem>>, %arg5: memref<1x256xf32, #tpu.memory_space<vmem>>, %arg6: memref<256x128xf32, #tpu.memory_space<vmem>>, %arg7: memref<1x128xf32, #tpu.memory_space<vmem>>, %arg8: memref<2x128xf32, #tpu.memory_space<vmem>>) attributes {dimension_semantics = [#tpu.dimension_semantics<parallel>], iteration_bounds = array<i64: 1>, scalar_prefetch = 0 : i64, scratch_operands = 0 : i64, tpu.core_type = #tpu.core_type<tc>, window_params = [{transform_indices = @transform_0, window_bounds = array<i64: 2, 8>}, {pipeline_mode = #tpu.pipeline_mode<synchronous>, transform_indices = @transform_1, window_bounds = array<i64: 8, 256>}, {pipeline_mode = #tpu.pipeline_mode<synchronous>, transform_indices = @transform_2, window_bounds = array<i64: 1, 256>}, {pipeline_mode = #tpu.pipeline_mode<synchronous>, transform_indices = @transform_3, window_bounds = array<i64: 256, 256>}, {pipeline_mode = #tpu.pipeline_mode<synchronous>, transform_indices = @transform_4, window_bounds = array<i64: 1, 256>}, {pipeline_mode = #tpu.pipeline_mode<synchronous>, transform_indices = @transform_5, window_bounds = array<i64: 256, 128>}, {pipeline_mode = #tpu.pipeline_mode<synchronous>, transform_indices = @transform_6, window_bounds = array<i64: 1, 128>}, {transform_indices = @transform_7, window_bounds = array<i64: 2, 128>}]} {
    %c0 = arith.constant 0 : index
    %c0_0 = arith.constant 0 : index
    %0 = vector.load %arg1[%c0, %c0_0] : memref<2x8xf32, #tpu.memory_space<vmem>>, vector<2x8xf32>
    %c0_1 = arith.constant 0 : index
    %c0_2 = arith.constant 0 : index
    %1 = vector.load %arg2[%c0_1, %c0_2] : memref<8x256xf32, #tpu.memory_space<vmem>>, vector<8x256xf32>
    %cst = arith.constant dense<0.000000e+00> : vector<2x256xf32>
    %2 = tpu.matmul %0, %1, %cst {dimension_numbers = #tpu.dot_dimension_numbers<[1], [0], [0], [1], [0, 0, 1, 1], [], []>} : vector<2x8xf32>, vector<8x256xf32>, vector<2x256xf32> -> vector<2x256xf32>
    %c0_3 = arith.constant 0 : index
    %c0_4 = arith.constant 0 : index
    %3 = vector.load %arg3[%c0_3, %c0_4] : memref<1x256xf32, #tpu.memory_space<vmem>>, vector<1x256xf32>
    %4 = vector.broadcast %3 : vector<1x256xf32> to vector<2x256xf32>
    %5 = arith.addf %2, %4 : vector<2x256xf32>
    %cst_5 = arith.constant 5.000000e-01 : f32
    %6 = vector.broadcast %cst_5 : f32 to vector<2x256xf32>
    %7 = arith.mulf %6, %5 : vector<2x256xf32>
    %8 = math.tanh %7 : vector<2x256xf32>
    %cst_6 = arith.constant 5.000000e-01 : f32
    %9 = vector.broadcast %cst_6 : f32 to vector<2x256xf32>
    %10 = arith.mulf %9, %8 : vector<2x256xf32>
    %cst_7 = arith.constant 5.000000e-01 : f32
    %11 = vector.broadcast %cst_7 : f32 to vector<2x256xf32>
    %12 = arith.addf %10, %11 : vector<2x256xf32>
    %c0_8 = arith.constant 0 : index
    %c0_9 = arith.constant 0 : index
    %13 = vector.load %arg4[%c0_8, %c0_9] : memref<256x256xf32, #tpu.memory_space<vmem>>, vector<256x256xf32>
    %cst_10 = arith.constant dense<0.000000e+00> : vector<2x256xf32>
    %14 = tpu.matmul %12, %13, %cst_10 {dimension_numbers = #tpu.dot_dimension_numbers<[1], [0], [0], [1], [0, 0, 1, 1], [], []>} : vector<2x256xf32>, vector<256x256xf32>, vector<2x256xf32> -> vector<2x256xf32>
    %c0_11 = arith.constant 0 : index
    %c0_12 = arith.constant 0 : index
    %15 = vector.load %arg5[%c0_11, %c0_12] : memref<1x256xf32, #tpu.memory_space<vmem>>, vector<1x256xf32>
    %16 = vector.broadcast %15 : vector<1x256xf32> to vector<2x256xf32>
    %17 = arith.addf %14, %16 : vector<2x256xf32>
    %cst_13 = arith.constant 5.000000e-01 : f32
    %18 = vector.broadcast %cst_13 : f32 to vector<2x256xf32>
    %19 = arith.mulf %18, %17 : vector<2x256xf32>
    %20 = math.tanh %19 : vector<2x256xf32>
    %cst_14 = arith.constant 5.000000e-01 : f32
    %21 = vector.broadcast %cst_14 : f32 to vector<2x256xf32>
    %22 = arith.mulf %21, %20 : vector<2x256xf32>
    %cst_15 = arith.constant 5.000000e-01 : f32
    %23 = vector.broadcast %cst_15 : f32 to vector<2x256xf32>
    %24 = arith.addf %22, %23 : vector<2x256xf32>
    %c0_16 = arith.constant 0 : index
    %c0_17 = arith.constant 0 : index
    %25 = vector.load %arg6[%c0_16, %c0_17] : memref<256x128xf32, #tpu.memory_space<vmem>>, vector<256x128xf32>
    %cst_18 = arith.constant dense<0.000000e+00> : vector<2x128xf32>
    %26 = tpu.matmul %24, %25, %cst_18 {dimension_numbers = #tpu.dot_dimension_numbers<[1], [0], [0], [1], [0, 0, 1, 1], [], []>} : vector<2x256xf32>, vector<256x128xf32>, vector<2x128xf32> -> vector<2x128xf32>
    %c0_19 = arith.constant 0 : index
    %c0_20 = arith.constant 0 : index
    %27 = vector.load %arg7[%c0_19, %c0_20] : memref<1x128xf32, #tpu.memory_space<vmem>>, vector<1x128xf32>
    %28 = vector.broadcast %27 : vector<1x128xf32> to vector<2x128xf32>
    %29 = arith.addf %26, %28 : vector<2x128xf32>
    %cst_21 = arith.constant 5.000000e-01 : f32
    %30 = vector.broadcast %cst_21 : f32 to vector<2x128xf32>
    %31 = arith.mulf %30, %29 : vector<2x128xf32>
    %32 = math.tanh %31 : vector<2x128xf32>
    %cst_22 = arith.constant 5.000000e-01 : f32
    %33 = vector.broadcast %cst_22 : f32 to vector<2x128xf32>
    %34 = arith.mulf %33, %32 : vector<2x128xf32>
    %cst_23 = arith.constant 5.000000e-01 : f32
    %35 = vector.broadcast %cst_23 : f32 to vector<2x128xf32>
    %36 = arith.addf %34, %35 : vector<2x128xf32>
    %cst_24 = arith.constant 1.200000e+01 : f32
    %37 = vector.broadcast %cst_24 : f32 to vector<2x128xf32>
    %38 = arith.mulf %36, %37 : vector<2x128xf32>
    %c0_25 = arith.constant 0 : index
    %c0_26 = arith.constant 0 : index
    %39 = vector.load %arg8[%c0_25, %c0_26] : memref<2x128xf32, #tpu.memory_space<vmem>>, vector<2x128xf32>
    tpu.vector_store %arg8[%c0_25, %c0_26], %38 {strides = array<i32>} : memref<2x128xf32, #tpu.memory_space<vmem>>, vector<2x128xf32>,
    return
  }
  func.func @transform_0(%arg0: i32) -> (i32, i32) {
    %c0_i32 = arith.constant 0 : i32
    %c0_i32_0 = arith.constant 0 : i32
    return %arg0, %c0_i32 : i32, i32
  }
  func.func @transform_1(%arg0: i32) -> (i32, i32) {
    %c0_i32 = arith.constant 0 : i32
    %c0_i32_0 = arith.constant 0 : i32
    %c0_i32_1 = arith.constant 0 : i32
    return %c0_i32, %c0_i32_0 : i32, i32
  }
  func.func @transform_2(%arg0: i32) -> (i32, i32) {
    %c0_i32 = arith.constant 0 : i32
    %c0_i32_0 = arith.constant 0 : i32
    %c0_i32_1 = arith.constant 0 : i32
    return %c0_i32, %c0_i32_0 : i32, i32
  }
  func.func @transform_3(%arg0: i32) -> (i32, i32) {
    %c0_i32 = arith.constant 0 : i32
    %c0_i32_0 = arith.constant 0 : i32
    %c0_i32_1 = arith.constant 0 : i32
    return %c0_i32, %c0_i32_0 : i32, i32
  }
  func.func @transform_4(%arg0: i32) -> (i32, i32) {
    %c0_i32 = arith.constant 0 : i32
    %c0_i32_0 = arith.constant 0 : i32
    %c0_i32_1 = arith.constant 0 : i32
    return %c0_i32, %c0_i32_0 : i32, i32
  }
  func.func @transform_5(%arg0: i32) -> (i32, i32) {
    %c0_i32 = arith.constant 0 : i32
    %c0_i32_0 = arith.constant 0 : i32
    %c0_i32_1 = arith.constant 0 : i32
    return %c0_i32, %c0_i32_0 : i32, i32
  }
  func.func @transform_6(%arg0: i32) -> (i32, i32) {
    %c0_i32 = arith.constant 0 : i32
    %c0_i32_0 = arith.constant 0 : i32
    %c0_i32_1 = arith.constant 0 : i32
    return %c0_i32, %c0_i32_0 : i32, i32
  }
  func.func @transform_7(%arg0: i32) -> (i32, i32) {
    %c0_i32 = arith.constant 0 : i32
    %c0_i32_0 = arith.constant 0 : i32
    return %arg0, %c0_i32 : i32, i32
  }
}

</mosaic_0001>

<llo_original>
// kernel: tpu_custom_call.1
$region0: #{tpu_custom_call.1}
  #allocation0 [shape = 'u32[]', space=smem, size = 0x4, offset = 0x4, fixed_abs, tag = 'smem constant byte address 0x4 - core index']
  #allocation1 [shape = 'u32[144,128]{1,0:T(1,128)}', space=vmem, size = 0x12000, scoped, tag = 'internal scratch']
  %s0 = inlined_call_operand.hbm [shape: f32[2,8], index: 0, kind: input, shape index: {}]
  %s1 = inlined_call_operand.hbm [shape: f32[8,256], index: 1, kind: input, shape index: {}]
  %s2 = inlined_call_operand.vmem [shape: f32[1,256], index: 2, kind: input, shape index: {}]
  %s3 = inlined_call_operand.hbm [shape: f32[256,256], index: 3, kind: input, shape index: {}]
  %s4 = inlined_call_operand.vmem [shape: f32[1,256], index: 4, kind: input, shape index: {}]
  %s5 = inlined_call_operand.hbm [shape: f32[256,128], index: 5, kind: input, shape index: {}]
  %s6 = inlined_call_operand.vmem [shape: f32[1,128], index: 6, kind: input, shape index: {}]
  %s7 = inlined_call_operand.hbm [shape: f32[2,128], index: 7, kind: output, shape index: {}]
  %s8 = sld [smem:[#allocation0]]
  $region54: #{tpu_custom_call.1} parent=0
    _
  %s10 = ssub.s32 1, %s8
  %s11 = scalar_select 0, %s10, %s8
  $region1: #{tpu_custom_call.1} parent=0
    #allocation2 [shape = 'u8[1024]{0}', space=vmem, size = 0x400, scoped, tag = 'input window, operand 0, single buffered']
    #allocation3 [shape = 's32[1]{0}', space=sflag, size = 0x4, scoped, tag = 'scoped memory for tpu_custom_call.1']
    #allocation4 [shape = 's32[1]{0}', space=sflag, size = 0x4, scoped, tag = 'scoped memory for tpu_custom_call.1']
    #allocation5 [shape = 'u8[8192]{0}', space=vmem, size = 0x2000, scoped, tag = 'input window, operand 1, single buffered']
    #allocation6 [shape = 's32[1]{0}', space=sflag, size = 0x4, scoped, tag = 'scoped memory for tpu_custom_call.1']
    #allocation7 [shape = 'u8[262144]{0}', space=vmem, size = 0x40000, scoped, tag = 'input window, operand 3, single buffered']
    #allocation8 [shape = 'u8[131072]{0}', space=vmem, size = 0x20000, scoped, tag = 'input window, operand 5, single buffered']
    #allocation9 [shape = 's32[1]{0}', space=sflag, size = 0x4, scoped, tag = 'scoped memory for tpu_custom_call.1']
    #allocation10 [shape = 'u8[1024]{0}', space=vmem, size = 0x400, scoped, tag = 'output window, operand 0, single buffered']
    %12 = vsyncpa [#allocation3], 0
    %13 = vsyncpa [#allocation6], 0
    %14 = vsyncpa [#allocation9], 0
    %15 = vsyncpa [#allocation4], 0
    // Predicated region
    $region2: #{tpu_custom_call.1} parent=1 // pred_check
      _
    $region3: #{tpu_custom_call.1} parent=1 // pred_check_branch
      %17 = sbr.rel (0) target = $region5
    $region4: #{tpu_custom_call.1} parent=1 // pred_region
      %s19 = ssub.s32 32, 32
      %20 = vsyncadd [#allocation3], %s19
      %s22 = sshll.u32 [#allocation2], 4
      %s23 = int_to_ptr.vmem [resolvable:$true] %s22
      %25 = dma.hbm_to_vmem [thread:$0]  %s0, 32, %s23, [#allocation3]
    $region5: #{tpu_custom_call.1} parent=1 // pred_fallthru
      _
    // Predicated region
    $region6: #{tpu_custom_call.1} parent=1 // pred_check
      _
    $region7: #{tpu_custom_call.1} parent=1 // pred_check_branch
      %27 = sbr.rel (0) target = $region9
    $region8: #{tpu_custom_call.1} parent=1 // pred_region
      %s29 = ssub.s32 256, 256
      %30 = vsyncadd [#allocation6], %s29
      %s32 = sshll.u32 [#allocation5], 4
      %s33 = int_to_ptr.vmem [resolvable:$true] %s32
      %35 = dma.hbm_to_vmem [thread:$0]  %s1, 256, %s33, [#allocation6]
    $region9: #{tpu_custom_call.1} parent=1 // pred_fallthru
      _
    // Predicated region
    $region10: #{tpu_custom_call.1} parent=1 // pred_check
      _
    $region11: #{tpu_custom_call.1} parent=1 // pred_check_branch
      %37 = sbr.rel (0) target = $region13
    $region12: #{tpu_custom_call.1} parent=1 // pred_region
      _
    $region13: #{tpu_custom_call.1} parent=1 // pred_fallthru
      _
    // Predicated region
    $region14: #{tpu_custom_call.1} parent=1 // pred_check
      _
    $region15: #{tpu_custom_call.1} parent=1 // pred_check_branch
      %39 = sbr.rel (0) target = $region17
    $region16: #{tpu_custom_call.1} parent=1 // pred_region
      %s41 = ssub.s32 8192, 8192
      %42 = vsyncadd [#allocation6], %s41
      %s43 = sshll.u32 [#allocation7], 4
      %s44 = int_to_ptr.vmem [resolvable:$true] %s43
      %49 = dma.hbm_to_vmem [thread:$0]  %s3, 8192, %s44, [#allocation6], 256, 256, 16
    $region17: #{tpu_custom_call.1} parent=1 // pred_fallthru
      _
    // Predicated region
    $region18: #{tpu_custom_call.1} parent=1 // pred_check
      _
    $region19: #{tpu_custom_call.1} parent=1 // pred_check_branch
      %51 = sbr.rel (0) target = $region21
    $region20: #{tpu_custom_call.1} parent=1 // pred_region
      _
    $region21: #{tpu_custom_call.1} parent=1 // pred_fallthru
      _
    // Predicated region
    $region22: #{tpu_custom_call.1} parent=1 // pred_check
      _
    $region23: #{tpu_custom_call.1} parent=1 // pred_check_branch
      %53 = sbr.rel (0) target = $region25
    $region24: #{tpu_custom_call.1} parent=1 // pred_region
      %s55 = ssub.s32 4096, 4096
      %56 = vsyncadd [#allocation9], %s55
      %s57 = sshll.u32 [#allocation8], 4
      %s58 = int_to_ptr.vmem [resolvable:$true] %s57
      %63 = dma.hbm_to_vmem [thread:$0]  %s5, 4096, %s58, [#allocation9], 128, 128, 8
    $region25: #{tpu_custom_call.1} parent=1 // pred_fallthru
      _
    // Predicated region
    $region26: #{tpu_custom_call.1} parent=1 // pred_check
      _
    $region27: #{tpu_custom_call.1} parent=1 // pred_check_branch
      %65 = sbr.rel (0) target = $region29
    $region28: #{tpu_custom_call.1} parent=1 // pred_region
      _
    $region29: #{tpu_custom_call.1} parent=1 // pred_fallthru
      _
    // Predicated region
    $region30: #{tpu_custom_call.1} parent=1 // pred_check
      _
    $region31: #{tpu_custom_call.1} parent=1 // pred_check_branch
      %67 = sbr.rel (0) target = $region33
    $region32: #{tpu_custom_call.1} parent=1 // pred_region
      %68 = dma.done [#allocation3], 32
    $region33: #{tpu_custom_call.1} parent=1 // pred_fallthru
      _
    // Predicated region
    $region34: #{tpu_custom_call.1} parent=1 // pred_check
      _
    $region35: #{tpu_custom_call.1} parent=1 // pred_check_branch
      %70 = sbr.rel (0) target = $region37
    $region36: #{tpu_custom_call.1} parent=1 // pred_region
      %71 = dma.done [#allocation6], 256
    $region37: #{tpu_custom_call.1} parent=1 // pred_fallthru
      _
    // Predicated region
    $region38: #{tpu_custom_call.1} parent=1 // pred_check
      _
    $region39: #{tpu_custom_call.1} parent=1 // pred_check_branch
      %73 = sbr.rel (0) target = $region41
    $region40: #{tpu_custom_call.1} parent=1 // pred_region
      %74 = dma.done [#allocation6], 8192
    $region41: #{tpu_custom_call.1} parent=1 // pred_fallthru
      _
    // Predicated region
    $region42: #{tpu_custom_call.1} parent=1 // pred_check
      _
    $region43: #{tpu_custom_call.1} parent=1 // pred_check_branch
      %76 = sbr.rel (0) target = $region45
    $region44: #{tpu_custom_call.1} parent=1 // pred_region
      %77 = dma.done [#allocation9], 4096
    $region45: #{tpu_custom_call.1} parent=1 // pred_fallthru
      _
    %v78 = vld [vmem:[#allocation2] sm:$0x3]
    %v79 = vld [vmem:[#allocation5] sm:$0xff]
    %v80 = vld [vmem:[#allocation5 + $0x8] sm:$0xff]
    %v81 = vld [vmem:[%s2] sm:$0x3]
    %v83 = vlaneseq
    %v84 = vshrl.u32 %v83, 7
    %v85 = vsub.s32 0, %v84
    %v86 = vrot.slane %v81, %v85
    %v87 = vlaneseq
    %v88 = vshrl.u32 %v87, 7
    %v89 = vsub.s32 1, %v88
    %v90 = vrot.slane %v81, %v89
    %vm93 = vcmask 64512
    %v95 = vsel %vm93, %v78, 0
    %97 = vmatprep.subr.mxu0 0.0
    %98 = vmatpush1.msra.mxu0 0.0
    %99 = vmatprep.subr.mxu0 0.0
    %100 = vmatpush1.msra.mxu0 0.0
    %101 = vmatprep.subr.mxu0 0.0
    %102 = vmatpush1.msra.mxu0 0.0
    %103 = vmatprep.subr.mxu0 0.0
    %104 = vmatpush1.msra.mxu0 0.0
    %105 = vmatprep.subr.mxu0 0.0
    %106 = vmatpush1.msra.mxu0 0.0
    %107 = vmatprep.subr.mxu0 0.0
    %108 = vmatpush1.msra.mxu0 0.0
    %109 = vmatprep.subr.mxu0 0.0
    %110 = vmatpush1.msra.mxu0 0.0
    %111 = vmatprep.subr.mxu0 0.0
    %112 = vmatpush1.msra.mxu0 0.0
    %113 = vmatprep.subr.mxu0 0.0
    %114 = vmatpush1.msra.mxu0 0.0
    %115 = vmatprep.subr.mxu0 0.0
    %116 = vmatpush1.msra.mxu0 0.0
    %117 = vmatprep.subr.mxu0 0.0
    %118 = vmatpush1.msra.mxu0 0.0
    %119 = vmatprep.subr.mxu0 0.0
    %120 = vmatpush1.msra.mxu0 0.0
    %121 = vmatprep.subr.mxu0 0.0
    %122 = vmatpush1.msra.mxu0 0.0
    %123 = vmatprep.subr.mxu0 0.0
    %124 = vmatpush1.msra.mxu0 0.0
    %125 = vmatprep.subr.mxu0 0.0
    %126 = vmatpush1.msra.mxu0 0.0
    %127 = vmatprep.subr.mxu0 %v80
    %128 = vmatpush1.msra.mxu0 %v79
    %129 = vmatprep.subr.mxu0 0.0
    %130 = vmatpush2.msra.mxu0 0.0
    %131 = vmatprep.subr.mxu0 0.0
    %132 = vmatpush2.msra.mxu0 0.0
    %133 = vmatprep.subr.mxu0 0.0
    %134 = vmatpush2.msra.mxu0 0.0
    %135 = vmatprep.subr.mxu0 0.0
    %136 = vmatpush2.msra.mxu0 0.0
    %137 = vmatprep.subr.mxu0 0.0
    %138 = vmatpush2.msra.mxu0 0.0
    %139 = vmatprep.subr.mxu0 0.0
    %140 = vmatpush2.msra.mxu0 0.0
    %141 = vmatprep.subr.mxu0 0.0
    %142 = vmatpush2.msra.mxu0 0.0
    %143 = vmatprep.subr.mxu0 0.0
    %144 = vmatpush2.msra.mxu0 0.0
    %145 = vmatprep.subr.mxu0 0.0
    %146 = vmatpush2.msra.mxu0 0.0
    %147 = vmatprep.subr.mxu0 0.0
    %148 = vmatpush2.msra.mxu0 0.0
    %149 = vmatprep.subr.mxu0 0.0
    %150 = vmatpush2.msra.mxu0 0.0
    %151 = vmatprep.subr.mxu0 0.0
    %152 = vmatpush2.msra.mxu0 0.0
    %153 = vmatprep.subr.mxu0 0.0
    %154 = vmatpush2.msra.mxu0 0.0
    %155 = vmatprep.subr.mxu0 0.0
    %156 = vmatpush2.msra.mxu0 0.0
    %157 = vmatprep.subr.mxu0 0.0
    %158 = vmatpush2.msra.mxu0 0.0
    %159 = vmatprep.subr.mxu0 0.0
    %160 = vmatpush2.msra.mxu0 0.0
    %161 = vmatprep.mubr.f32.mxu0 0.0
    %162 = vmatmul.mubr.f32.gmra.mxu0 %v95
    %v163 = vpop.f32.mrf.mxu0
    %v164 = vadd.f32 %v86, %v163
    %v165 = vpop.f32.mrf.mxu0
    %v166 = vadd.f32 %v90, %v165
    %167 = vdwg.mxu0
    %v168 = vmul.f32 %v164, 0.5
    %v169 = vmul.f32 %v166, 0.5
    %v170 = vtanh.pop %v168
    %v171 = vtanh.pop %v169
    %v172 = vmul.f32 %v170, 0.5
    %v173 = vmul.f32 %v171, 0.5
    %v174 = vadd.f32 %v172, 0.5
    %v175 = vadd.f32 %v173, 0.5
    %v176 = vld [vmem:[#allocation7] sm:$0xff]
    %v177 = vld [vmem:[#allocation7 + $0x8] sm:$0xff]
    %v178 = vld [vmem:[#allocation7 + $0x10] sm:$0xff]
    %v179 = vld [vmem:[#allocation7 + $0x18] sm:$0xff]
    %v180 = vld [vmem:[#allocation7 + $0x20] sm:$0xff]
    %v181 = vld [vmem:[#allocation7 + $0x28] sm:$0xff]
    %v182 = vld [vmem:[#allocation7 + $0x30] sm:$0xff]
    %v183 = vld [vmem:[#allocation7 + $0x38] sm:$0xff]
    %v184 = vld [vmem:[#allocation7 + $0x40] sm:$0xff]
    %v185 = vld [vmem:[#allocation7 + $0x48] sm:$0xff]
    %v186 = vld [vmem:[#allocation7 + $0x50] sm:$0xff]
    %v187 = vld [vmem:[#allocation7 + $0x58] sm:$0xff]
    %v188 = vld [vmem:[#allocation7 + $0x60] sm:$0xff]
    %v189 = vld [vmem:[#allocation7 + $0x68] sm:$0xff]
    %v190 = vld [vmem:[#allocation7 + $0x70] sm:$0xff]
    %v191 = vld [vmem:[#allocation7 + $0x78] sm:$0xff]
    %v192 = vld [vmem:[#allocation7 + $0x80] sm:$0xff]
    %v193 = vld [vmem:[#allocation7 + $0x88] sm:$0xff]
    %v194 = vld [vmem:[#allocation7 + $0x90] sm:$0xff]
    %v195 = vld [vmem:[#allocation7 + $0x98] sm:$0xff]
    %v196 = vld [vmem:[#allocation7 + $0xa0] sm:$0xff]
    %v197 = vld [vmem:[#allocation7 + $0xa8] sm:$0xff]
    %v198 = vld [vmem:[#allocation7 + $0xb0] sm:$0xff]
    %v199 = vld [vmem:[#allocation7 + $0xb8] sm:$0xff]
    %v200 = vld [vmem:[#allocation7 + $0xc0] sm:$0xff]
    %v201 = vld [vmem:[#allocation7 + $0xc8] sm:$0xff]
    %v202 = vld [vmem:[#allocation7 + $0xd0] sm:$0xff]
    %v203 = vld [vmem:[#allocation7 + $0xd8] sm:$0xff]
    %v204 = vld [vmem:[#allocation7 + $0xe0] sm:$0xff]
    %v205 = vld [vmem:[#allocation7 + $0xe8] sm:$0xff]
    %v206 = vld [vmem:[#allocation7 + $0xf0] sm:$0xff]
    %v207 = vld [vmem:[#allocation7 + $0xf8] sm:$0xff]
    %v208 = vld [vmem:[#allocation7 + $0x100] sm:$0xff]
    %v209 = vld [vmem:[#allocation7 + $0x108] sm:$0xff]
    %v210 = vld [vmem:[#allocation7 + $0x110] sm:$0xff]
    %v211 = vld [vmem:[#allocation7 + $0x118] sm:$0xff]
    %v212 = vld [vmem:[#allocation7 + $0x120] sm:$0xff]
    %v213 = vld [vmem:[#allocation7 + $0x128] sm:$0xff]
    %v214 = vld [vmem:[#allocation7 + $0x130] sm:$0xff]
    %v215 = vld [vmem:[#allocation7 + $0x138] sm:$0xff]
    %v216 = vld [vmem:[#allocation7 + $0x140] sm:$0xff]
    %v217 = vld [vmem:[#allocation7 + $0x148] sm:$0xff]
    %v218 = vld [vmem:[#allocation7 + $0x150] sm:$0xff]
    %v219 = vld [vmem:[#allocation7 + $0x158] sm:$0xff]
    %v220 = vld [vmem:[#allocation7 + $0x160] sm:$0xff]
    %v221 = vld [vmem:[#allocation7 + $0x168] sm:$0xff]
    %v222 = vld [vmem:[#allocation7 + $0x170] sm:$0xff]
    %v223 = vld [vmem:[#allocation7 + $0x178] sm:$0xff]
    %v224 = vld [vmem:[#allocation7 + $0x180] sm:$0xff]
    %v225 = vld [vmem:[#allocation7 + $0x188] sm:$0xff]
    %v226 = vld [vmem:[#allocation7 + $0x190] sm:$0xff]
    %v227 = vld [vmem:[#allocation7 + $0x198] sm:$0xff]
    %v228 = vld [vmem:[#allocation7 + $0x1a0] sm:$0xff]
    %v229 = vld [vmem:[#allocation7 + $0x1a8] sm:$0xff]
    %v230 = vld [vmem:[#allocation7 + $0x1b0] sm:$0xff]
    %v231 = vld [vmem:[#allocation7 + $0x1b8] sm:$0xff]
    %v232 = vld [vmem:[#allocation7 + $0x1c0] sm:$0xff]
    %v233 = vld [vmem:[#allocation7 + $0x1c8] sm:$0xff]
    %v234 = vld [vmem:[#allocation7 + $0x1d0] sm:$0xff]
    %v235 = vld [vmem:[#allocation7 + $0x1d8] sm:$0xff]
    %v236 = vld [vmem:[#allocation7 + $0x1e0] sm:$0xff]
    %v237 = vld [vmem:[#allocation7 + $0x1e8] sm:$0xff]
    %v238 = vld [vmem:[#allocation7 + $0x1f0] sm:$0xff]
    %v239 = vld [vmem:[#allocation7 + $0x1f8] sm:$0xff]
    %v240 = vld [vmem:[%s4] sm:$0x3]
    %v242 = vlaneseq
    %v243 = vshrl.u32 %v242, 7
    %v244 = vsub.s32 0, %v243
    %v245 = vrot.slane %v240, %v244
    %v246 = vlaneseq
    %v247 = vshrl.u32 %v246, 7
    %v248 = vsub.s32 1, %v247
    %v249 = vrot.slane %v240, %v248
    %252 = vmatprep.subr.mxu0 %v207
    %253 = vmatpush1.msra.mxu0 %v206
    %254 = vmatprep.subr.mxu0 %v205
    %255 = vmatpush1.msra.mxu0 %v204
    %256 = vmatprep.subr.mxu0 %v203
    %257 = vmatpush1.msra.mxu0 %v202
    %258 = vmatprep.subr.mxu0 %v201
    %259 = vmatpush1.msra.mxu0 %v200
    %260 = vmatprep.subr.mxu0 %v199
    %261 = vmatpush1.msra.mxu0 %v198
    %262 = vmatprep.subr.mxu0 %v197
    %263 = vmatpush1.msra.mxu0 %v196
    %264 = vmatprep.subr.mxu0 %v195
    %265 = vmatpush1.msra.mxu0 %v194
    %266 = vmatprep.subr.mxu0 %v193
    %267 = vmatpush1.msra.mxu0 %v192
    %268 = vmatprep.subr.mxu0 %v191
    %269 = vmatpush1.msra.mxu0 %v190
    %270 = vmatprep.subr.mxu0 %v189
    %271 = vmatpush1.msra.mxu0 %v188
    %272 = vmatprep.subr.mxu0 %v187
    %273 = vmatpush1.msra.mxu0 %v186
    %274 = vmatprep.subr.mxu0 %v185
    %275 = vmatpush1.msra.mxu0 %v184
    %276 = vmatprep.subr.mxu0 %v183
    %277 = vmatpush1.msra.mxu0 %v182
    %278 = vmatprep.subr.mxu0 %v181
    %279 = vmatpush1.msra.mxu0 %v180
    %280 = vmatprep.subr.mxu0 %v179
    %281 = vmatpush1.msra.mxu0 %v178
    %282 = vmatprep.subr.mxu0 %v177
    %283 = vmatpush1.msra.mxu0 %v176
    %284 = vmatprep.subr.mxu0 %v239
    %285 = vmatpush2.msra.mxu0 %v238
    %286 = vmatprep.subr.mxu0 %v237
    %287 = vmatpush2.msra.mxu0 %v236
    %288 = vmatprep.subr.mxu0 %v235
    %289 = vmatpush2.msra.mxu0 %v234
    %290 = vmatprep.subr.mxu0 %v233
    %291 = vmatpush2.msra.mxu0 %v232
    %292 = vmatprep.subr.mxu0 %v231
    %293 = vmatpush2.msra.mxu0 %v230
    %294 = vmatprep.subr.mxu0 %v229
    %295 = vmatpush2.msra.mxu0 %v228
    %296 = vmatprep.subr.mxu0 %v227
    %297 = vmatpush2.msra.mxu0 %v226
    %298 = vmatprep.subr.mxu0 %v225
    %299 = vmatpush2.msra.mxu0 %v224
    %300 = vmatprep.subr.mxu0 %v223
    %301 = vmatpush2.msra.mxu0 %v222
    %302 = vmatprep.subr.mxu0 %v221
    %303 = vmatpush2.msra.mxu0 %v220
    %304 = vmatprep.subr.mxu0 %v219
    %305 = vmatpush2.msra.mxu0 %v218
    %306 = vmatprep.subr.mxu0 %v217
    %307 = vmatpush2.msra.mxu0 %v216
    %308 = vmatprep.subr.mxu0 %v215
    %309 = vmatpush2.msra.mxu0 %v214
    %310 = vmatprep.subr.mxu0 %v213
    %311 = vmatpush2.msra.mxu0 %v212
    %312 = vmatprep.subr.mxu0 %v211
    %313 = vmatpush2.msra.mxu0 %v210
    %314 = vmatprep.subr.mxu0 %v209
    %315 = vmatpush2.msra.mxu0 %v208
    %316 = vmatprep.mubr.f32.mxu0 %v175
    %317 = vmatmul.mubr.f32.gmra.mxu0 %v174
    %v318 = vpop.f32.mrf.mxu0
    %v319 = vadd.f32 %v245, %v318
    %v320 = vpop.f32.mrf.mxu0
    %v321 = vadd.f32 %v249, %v320
    %322 = vdwg.mxu0
    %v323 = vmul.f32 %v319, 0.5
    %v324 = vmul.f32 %v321, 0.5
    %v325 = vtanh.pop %v323
    %v326 = vtanh.pop %v324
    %v327 = vmul.f32 %v325, 0.5
    %v328 = vmul.f32 %v326, 0.5
    %v329 = vadd.f32 %v327, 0.5
    %v330 = vadd.f32 %v328, 0.5
    %v331 = vld [vmem:[#allocation8] sm:$0xff]
    %v332 = vld [vmem:[#allocation8 + $0x8] sm:$0xff]
    %v333 = vld [vmem:[#allocation8 + $0x10] sm:$0xff]
    %v334 = vld [vmem:[#allocation8 + $0x18] sm:$0xff]
    %v335 = vld [vmem:[#allocation8 + $0x20] sm:$0xff]
    %v336 = vld [vmem:[#allocation8 + $0x28] sm:$0xff]
    %v337 = vld [vmem:[#allocation8 + $0x30] sm:$0xff]
    %v338 = vld [vmem:[#allocation8 + $0x38] sm:$0xff]
    %v339 = vld [vmem:[#allocation8 + $0x40] sm:$0xff]
    %v340 = vld [vmem:[#allocation8 + $0x48] sm:$0xff]
    %v341 = vld [vmem:[#allocation8 + $0x50] sm:$0xff]
    %v342 = vld [vmem:[#allocation8 + $0x58] sm:$0xff]
    %v343 = vld [vmem:[#allocation8 + $0x60] sm:$0xff]
    %v344 = vld [vmem:[#allocation8 + $0x68] sm:$0xff]
    %v345 = vld [vmem:[#allocation8 + $0x70] sm:$0xff]
    %v346 = vld [vmem:[#allocation8 + $0x78] sm:$0xff]
    %v347 = vld [vmem:[#allocation8 + $0x80] sm:$0xff]
    %v348 = vld [vmem:[#allocation8 + $0x88] sm:$0xff]
    %v349 = vld [vmem:[#allocation8 + $0x90] sm:$0xff]
    %v350 = vld [vmem:[#allocation8 + $0x98] sm:$0xff]
    %v351 = vld [vmem:[#allocation8 + $0xa0] sm:$0xff]
    %v352 = vld [vmem:[#allocation8 + $0xa8] sm:$0xff]
    %v353 = vld [vmem:[#allocation8 + $0xb0] sm:$0xff]
    %v354 = vld [vmem:[#allocation8 + $0xb8] sm:$0xff]
    %v355 = vld [vmem:[#allocation8 + $0xc0] sm:$0xff]
    %v356 = vld [vmem:[#allocation8 + $0xc8] sm:$0xff]
    %v357 = vld [vmem:[#allocation8 + $0xd0] sm:$0xff]
    %v358 = vld [vmem:[#allocation8 + $0xd8] sm:$0xff]
    %v359 = vld [vmem:[#allocation8 + $0xe0] sm:$0xff]
    %v360 = vld [vmem:[#allocation8 + $0xe8] sm:$0xff]
    %v361 = vld [vmem:[#allocation8 + $0xf0] sm:$0xff]
    %v362 = vld [vmem:[#allocation8 + $0xf8] sm:$0xff]
    %v363 = vld [vmem:[%s6] sm:$0x1]
    %v365 = vlaneseq
    %v366 = vshrl.u32 %v365, 7
    %v367 = vsub.s32 0, %v366
    %v368 = vrot.slane %v363, %v367
    %370 = vmatprep.subr.mxu0 0.0
    %371 = vmatpush1.msra.mxu0 %v346
    %372 = vmatprep.subr.mxu0 0.0
    %373 = vmatpush1.msra.mxu0 %v345
    %374 = vmatprep.subr.mxu0 0.0
    %375 = vmatpush1.msra.mxu0 %v344
    %376 = vmatprep.subr.mxu0 0.0
    %377 = vmatpush1.msra.mxu0 %v343
    %378 = vmatprep.subr.mxu0 0.0
    %379 = vmatpush1.msra.mxu0 %v342
    %380 = vmatprep.subr.mxu0 0.0
    %381 = vmatpush1.msra.mxu0 %v341
    %382 = vmatprep.subr.mxu0 0.0
    %383 = vmatpush1.msra.mxu0 %v340
    %384 = vmatprep.subr.mxu0 0.0
    %385 = vmatpush1.msra.mxu0 %v339
    %386 = vmatprep.subr.mxu0 0.0
    %387 = vmatpush1.msra.mxu0 %v338
    %388 = vmatprep.subr.mxu0 0.0
    %389 = vmatpush1.msra.mxu0 %v337
    %390 = vmatprep.subr.mxu0 0.0
    %391 = vmatpush1.msra.mxu0 %v336
    %392 = vmatprep.subr.mxu0 0.0
    %393 = vmatpush1.msra.mxu0 %v335
    %394 = vmatprep.subr.mxu0 0.0
    %395 = vmatpush1.msra.mxu0 %v334
    %396 = vmatprep.subr.mxu0 0.0
    %397 = vmatpush1.msra.mxu0 %v333
    %398 = vmatprep.subr.mxu0 0.0
    %399 = vmatpush1.msra.mxu0 %v332
    %400 = vmatprep.subr.mxu0 0.0
    %401 = vmatpush1.msra.mxu0 %v331
    %402 = vmatprep.subr.mxu0 0.0
    %403 = vmatpush2.msra.mxu0 %v362
    %404 = vmatprep.subr.mxu0 0.0
    %405 = vmatpush2.msra.mxu0 %v361
    %406 = vmatprep.subr.mxu0 0.0
    %407 = vmatpush2.msra.mxu0 %v360
    %408 = vmatprep.subr.mxu0 0.0
    %409 = vmatpush2.msra.mxu0 %v359
    %410 = vmatprep.subr.mxu0 0.0
    %411 = vmatpush2.msra.mxu0 %v358
    %412 = vmatprep.subr.mxu0 0.0
    %413 = vmatpush2.msra.mxu0 %v357
    %414 = vmatprep.subr.mxu0 0.0
    %415 = vmatpush2.msra.mxu0 %v356
    %416 = vmatprep.subr.mxu0 0.0
    %417 = vmatpush2.msra.mxu0 %v355
    %418 = vmatprep.subr.mxu0 0.0
    %419 = vmatpush2.msra.mxu0 %v354
    %420 = vmatprep.subr.mxu0 0.0
    %421 = vmatpush2.msra.mxu0 %v353
    %422 = vmatprep.subr.mxu0 0.0
    %423 = vmatpush2.msra.mxu0 %v352
    %424 = vmatprep.subr.mxu0 0.0
    %425 = vmatpush2.msra.mxu0 %v351
    %426 = vmatprep.subr.mxu0 0.0
    %427 = vmatpush2.msra.mxu0 %v350
    %428 = vmatprep.subr.mxu0 0.0
    %429 = vmatpush2.msra.mxu0 %v349
    %430 = vmatprep.subr.mxu0 0.0
    %431 = vmatpush2.msra.mxu0 %v348
    %432 = vmatprep.subr.mxu0 0.0
    %433 = vmatpush2.msra.mxu0 %v347
    %434 = vmatprep.mubr.f32.mxu0 %v330
    %435 = vmatmul.mubr.f32.gmra.mxu0 %v329
    %v436 = vpop.f32.mrf.mxu0
    %v437 = vadd.f32 %v368, %v436
    %v438 = vpop.f32.mrf.mxu0
    %439 = vdwg.mxu0
    %v440 = vmul.f32 %v437, 0.5
    %v441 = vtanh.pop %v440
    %v442 = vmul.f32 %v441, 0.5
    %v443 = vadd.f32 %v442, 0.5
    %v444 = vmul.f32 %v443, 12.0
    %445 = vst [vmem:[#allocation10] sm:$0x3] %v444
    // Predicated region
    $region46: #{tpu_custom_call.1} parent=1 // pred_check
      _
    $region47: #{tpu_custom_call.1} parent=1 // pred_check_branch
      %447 = sbr.rel (0) target = $region49
    $region48: #{tpu_custom_call.1} parent=1 // pred_region
      %s449 = ssub.s32 32, 32
      %450 = vsyncadd [#allocation4], %s449
      %s452 = sshll.u32 [#allocation10], 4
      %s453 = int_to_ptr.vmem [resolvable:$true] %s452
      %455 = dma.vmem_to_hbm [thread:$0]  %s453, 32, %s7, [#allocation4]
    $region49: #{tpu_custom_call.1} parent=1 // pred_fallthru
      _
    // Predicated region
    $region50: #{tpu_custom_call.1} parent=1 // pred_check
      _
    $region51: #{tpu_custom_call.1} parent=1 // pred_check_branch
      %457 = sbr.rel (0) target = $region53
    $region52: #{tpu_custom_call.1} parent=1 // pred_region
      %458 = dma.done [#allocation4], 32
    $region53: #{tpu_custom_call.1} parent=1 // pred_fallthru
      _
    %459 = vsyncpa [#allocation3], 1
    %460 = vsyncpa [#allocation6], 1
    %461 = vsyncpa [#allocation9], 1
    %462 = vsyncpa [#allocation4], 1

</llo_original>
